<compile_context>
chip_gen: v6e
topology: v6e:2x2x1
jax: 0.10.0
libtpu: 0.0.40
codegen_flags: <defaults>
</compile_context>

<pallas_src>
import functools

import jax
import jax.numpy as jnp
from jax.experimental import pallas as pl
from jax.experimental.pallas import tpu as pltpu


def _patch_embed_kernel(w_ref, x_ref, o_ref):
    # w_ref: [E, K]        VMEM-resident flattened conv weight (bf16)
    # x_ref: [bb, K, TM]   one token tile of bb images (bf16)
    # o_ref: [bb, E, TM]   output tile, channels-major
    w = w_ref[...]
    for i in range(o_ref.shape[0]):  # static unroll over the bb images in this block
        o_ref[i] = jnp.dot(
            w, x_ref[i], preferred_element_type=jnp.float32
        ).astype(o_ref.dtype)


def _choose_tiles(batch, n_tokens):
    """Pick (bb images per grid step, tm token-columns per grid step)."""
    if n_tokens >= 512:
        # Large token counts: 512-wide lane-dense tiles, one image per step.
        tm = 512 if batch * pl.cdiv(n_tokens, 512) >= 2 else 256
        return 1, tm
    if batch == 1:
        # Single image: split the token dim (when >=256) so both v7x TCs get work.
        tm = n_tokens if n_tokens < 256 else 128
        return 1, tm
    # Small token count per image: take the whole token dim in one block
    # (block dim == full array dim, so no 128-alignment requirement) and batch
    # several images per grid step to amortize the fixed per-step overhead.
    tm = n_tokens
    bb = max(1, min(batch, 1024 // max(tm, 1)))
    while bb > 1 and batch // bb < 2:   # keep >=2 grid steps for v7x's 2 TensorCores
        bb //= 2
    while batch % bb != 0:              # divisor of batch -> no ragged leading blocks
        bb -= 1
    return bb, tm


def patch_embed_matmul(w2d, x3d, out_dtype, bb, tm):
    """w2d: [E, K] (bf16), x3d: [B, K, N] (bf16) -> [B, E, N] (out_dtype)."""
    E, K = w2d.shape
    B, _, N = x3d.shape
    out_isz = jnp.dtype(out_dtype).itemsize

    # Real VMEM footprint (weight + double-buffered activation/output tiles) plus margin,
    # never below the 32 MiB scoped default, never the full 64 MiB of a v7x core.
    vmem_bytes = 2 * E * K * 2 + 2 * bb * K * tm * 2 + 2 * bb * E * tm * out_isz
    vmem_limit = int(min(48 * 1024 * 1024, max(32 * 1024 * 1024, vmem_bytes + 4 * 1024 * 1024)))

    return pl.pallas_call(
        _patch_embed_kernel,
        out_shape=jax.ShapeDtypeStruct((B, E, N), out_dtype),
        grid_spec=pltpu.PrefetchScalarGridSpec(
            num_scalar_prefetch=0,
            grid=(B // bb, pl.cdiv(N, tm)),
            in_specs=[
                # Weight: constant block index -> fetched once, stays VMEM-resident.
                pl.BlockSpec((E, K), lambda b, i: (0, 0)),
                # Activations: bb images x one (K, tm) token tile per grid step.
                pl.BlockSpec((bb, K, tm), lambda b, i: (b, 0, i)),
            ],
            out_specs=pl.BlockSpec((bb, E, tm), lambda b, i: (b, 0, i)),
        ),
        compiler_params=pltpu.CompilerParams(
            dimension_semantics=("parallel", "parallel"),
            vmem_limit_bytes=vmem_limit,
        ),
        cost_estimate=pl.CostEstimate(
            flops=2 * B * N * K * E,
            transcendentals=0,
            bytes_accessed=E * K * 2 + B * K * N * 2 + B * E * N * out_isz,
        ),
    )(w2d, x3d)


@functools.partial(jax.jit, static_argnames=("patch_size", "patch_stride", "out_dtype"))
def patch_embed_forward(x_nchw, conv_weight, patch_size, patch_stride, out_dtype=None):
    """PatchEmbed.forward with norm = Identity (norm_layer=None).

    x_nchw:      [B, C, H, W]
    conv_weight: [E, C, p, p]   (nn.Conv2d weight, bias=False)
    returns:     [B, E, H//p, W//p]   (NCHW, matching nn.Conv2d output)
    """
    # TODO(synk): only the non-overlapping path (patch_stride == patch_size) is implemented;
    # a general strided/overlapping conv would need a different (im2col) kernel.
    assert patch_size == patch_stride, "non-overlapping patchify path"
    p = patch_size
    B, C, H, W = x_nchw.shape
    E = conv_weight.shape[0]
    Hp, Wp = H // p, W // p
    N = Hp * Wp            # tokens per image
    K = C * p * p
    if out_dtype is None:
        out_dtype = x_nchw.dtype

    # Crop any border pixels not covered by a full patch (Conv2d VALID semantics).
    x = x_nchw
    if H != Hp * p or W != Wp * p:
        x = x[:, :, : Hp * p, : Wp * p]

    # Cast to bf16 BEFORE the patchify transpose so XLA fuses the cast into the transpose
    # (single HBM pass over the activations). f32 accumulation happens inside the kernel.
    x = x.astype(jnp.bfloat16)

    # Patchify, channels-major tokens: [B,C,H,W] -> [B, K=(c,ph,pw), N=(hp,wp)].
    x = x.reshape(B, C, Hp, p, Wp, p)
    x = jnp.transpose(x, (0, 1, 3, 5, 2, 4))      # [B, C, p, p, Hp, Wp]
    x3d = x.reshape(B, K, N)

    # Flatten conv weight in the same (c, ph, pw) order: [E, K]. No K/E/N padding.
    w2d = conv_weight.reshape(E, K).astype(jnp.bfloat16)

    bb, tm = _choose_tiles(B, N)

    # Hot path: tiled MXU matmul, output already channels-major per image.
    y = patch_embed_matmul(w2d, x3d, out_dtype, bb, tm)   # [B, E, N]

    # Reshape of the trailing token dim to (Hp, Wp) is layout-free; no slicing needed.
    y = y.reshape(B, E, Hp, Wp)

    # norm = Identity (norm_layer=None in the PyTorch module).
    # TODO(synk): a non-None norm_layer (e.g. LayerNorm over E) would need a second kernel.
    return y


if __name__ == "__main__":
    key = jax.random.PRNGKey(0)
    k_x, k_w = jax.random.split(key)

    B, C, H, W = 2, 4, 16, 16
    patch_size = patch_stride = 4
    embed_dim = 32

    x = jax.random.normal(k_x, (B, C, H, W), dtype=jnp.float32)
    conv_w = (
        jax.random.normal(
            k_w, (embed_dim, C, patch_size, patch_size), dtype=jnp.float32
        )
        * 0.05
    )

    out = patch_embed_forward(x, conv_w, patch_size, patch_stride)
    out = jax.block_until_ready(out)

    # Reference: plain f32 conv. Tolerance reflects bf16 inputs (f32 accumulation).
    ref = jax.lax.conv_general_dilated(
        x, conv_w,
        window_strides=(patch_stride, patch_stride),
        padding="VALID",
        dimension_numbers=("NCHW", "OIHW", "NCHW"),
    )
    assert out.shape == (B, embed_dim, H // patch_size, W // patch_size)
    assert out.dtype == x.dtype
    assert jnp.allclose(out, ref, atol=2e-2, rtol=2e-2)

    print("KERNEL_OK")
</pallas_src>

<mosaic_0001>
module attributes {stable_mosaic.version = 11 : i64} {
  func.func @_patch_embed_kernel(%arg0: i32, %arg1: i32, %arg2: memref<32x64xbf16, #tpu.memory_space<vmem>>, %arg3: memref<1x64x16xbf16, #tpu.memory_space<vmem>>, %arg4: memref<1x32x16xf32, #tpu.memory_space<vmem>>) attributes {dimension_semantics = [#tpu.dimension_semantics<parallel>, #tpu.dimension_semantics<parallel>], iteration_bounds = array<i64: 2, 1>, scalar_prefetch = 0 : i64, scratch_operands = 0 : i64, tpu.core_type = #tpu.core_type<tc>, window_params = [{pipeline_mode = #tpu.pipeline_mode<synchronous>, transform_indices = @transform_0, window_bounds = array<i64: 32, 64>}, {transform_indices = @transform_1, window_bounds = array<i64: 1, 64, 16>}, {transform_indices = @transform_2, window_bounds = array<i64: 1, 32, 16>}]} {
    %c0 = arith.constant 0 : index
    %c0_0 = arith.constant 0 : index
    %0 = vector.load %arg2[%c0, %c0_0] : memref<32x64xbf16, #tpu.memory_space<vmem>>, vector<32x64xbf16>
    %c0_1 = arith.constant 0 : index
    %c0_2 = arith.constant 0 : index
    %c0_3 = arith.constant 0 : index
    %1 = vector.load %arg3[%c0_1, %c0_2, %c0_3] : memref<1x64x16xbf16, #tpu.memory_space<vmem>>, vector<1x64x16xbf16>
    %2 = vector.shape_cast %1 : vector<1x64x16xbf16> to vector<64x16xbf16>
    %cst = arith.constant dense<0.000000e+00> : vector<32x16xf32>
    %3 = tpu.matmul %0, %2, %cst {dimension_numbers = #tpu.dot_dimension_numbers<[1], [0], [0], [1], [0, 0, 1, 1], [], []>} : vector<32x64xbf16>, vector<64x16xbf16>, vector<32x16xf32> -> vector<32x16xf32>
    %c0_4 = arith.constant 0 : index
    %c0_5 = arith.constant 0 : index
    %c0_6 = arith.constant 0 : index
    %4 = vector.load %arg4[%c0_4, %c0_5, %c0_6] : memref<1x32x16xf32, #tpu.memory_space<vmem>>, vector<1x32x16xf32>
    %5 = vector.shape_cast %4 : vector<1x32x16xf32> to vector<32x16xf32>
    %6 = vector.shape_cast %3 : vector<32x16xf32> to vector<1x32x16xf32>
    tpu.vector_store %arg4[%c0_4, %c0_5, %c0_6], %6 {strides = array<i32>} : memref<1x32x16xf32, #tpu.memory_space<vmem>>, vector<1x32x16xf32>,
    return
  }
  func.func @transform_0(%arg0: i32, %arg1: i32) -> (i32, i32) {
    %c0_i32 = arith.constant 0 : i32
    %c0_i32_0 = arith.constant 0 : i32
    %c0_i32_1 = arith.constant 0 : i32
    return %c0_i32, %c0_i32_0 : i32, i32
  }
  func.func @transform_1(%arg0: i32, %arg1: i32) -> (i32, i32, i32) {
    %c0_i32 = arith.constant 0 : i32
    %c0_i32_0 = arith.constant 0 : i32
    return %arg0, %c0_i32, %arg1 : i32, i32, i32
  }
  func.func @transform_2(%arg0: i32, %arg1: i32) -> (i32, i32, i32) {
    %c0_i32 = arith.constant 0 : i32
    %c0_i32_0 = arith.constant 0 : i32
    return %arg0, %c0_i32, %arg1 : i32, i32, i32
  }
}

</mosaic_0001>

<llo_original>
// kernel: patch_embed_forward.1
$region0: #{patch_embed_forward.1}
  #allocation0 [shape = 'u32[]', space=smem, size = 0x4, offset = 0x4, fixed_abs, tag = 'smem constant byte address 0x4 - core index']
  #allocation1 [shape = 'u32[144,128]{1,0:T(1,128)}', space=vmem, size = 0x12000, scoped, tag = 'internal scratch']
  %s0 = inlined_call_operand.vmem [shape: bf16[32,64], index: 0, kind: input, shape index: {}]
  %s1 = inlined_call_operand.vmem [shape: bf16[2,64,16], index: 1, kind: input, shape index: {}]
  %s2 = inlined_call_operand.vmem [shape: f32[2,32,16], index: 2, kind: output, shape index: {}]
  %s3 = sld [smem:[#allocation0]]
  $region41: #{patch_embed_forward.1} parent=0
    _
  %s5 = ssub.s32 1, %s3
  %s6 = scalar_select 0, %s5, %s3
  loop: start=0, step=1, limit=4
  $region2: #{patch_embed_forward.1} parent=0 // loop_pre_header
    _
  $region3: #{patch_embed_forward.1} parent=0 // loop_header
    %s8 = sphi 0, %s12
    %p9 = scmp.ge.s32.totalorder %s8, 4
    %s15 = sphi 0, %s27
    %s16 = sphi 0, %s23
    %s17 = sphi 0, %s15
    %s18 = sphi 0, %s16
    %s19 = sphi 0, %s17
    %s20 = sphi 0, %s18
    %s28 = sphi 0, %s28
    %s30 = sphi 0, %s28
    %s31 = sphi 0, %s30
    %s45 = sphi 0, %s31
    %s53 = sphi 0, %s55
    %s56 = sphi 0, %s53
    %s57 = sphi 0, %s56
    %s73 = sphi 0, %s57
    %s81 = sphi 0, %s83
    %s84 = sphi 0, %s81
    %s85 = sphi 0, %s84
    %s101 = sphi 0, %s85
  $region4: #{patch_embed_forward.1} parent=0 // loop_header_branch
    %11 = sbr.rel (%p9) target = $region8
  $region5: #{patch_embed_forward.1} parent=0 // loop_body
    %s13 = ssub.s32 %s8, 1
    %s14 = ssub.s32 %s8, 2
    %s21 = sadd.s32 1, %s16
    %p22 = scmp.ge.s32.totalorder %s21, 1
    %s23 = scalar_select %p22, 0, %s21
    %s24 = sadd.s32 1, %s15
    %s25 = scalar_select %p22, %s24, %s15
    %p26 = scmp.ge.s32.totalorder %s25, 2
    %s27 = scalar_select %p26, 0, %s25
    %s29 = sadd.s32 %s28, 1
    %p32 = scmp.eq.s32.totalorder %s8, 1
    %p33 = scmp.ne.s32.totalorder %s28, %s30
    %p34 = scmp.eq.s32.totalorder %s8, 0
    %p35 = por %p33, %p34
    %p36 = scmp.ne.s32.totalorder %s28, %s30
    %p37 = scmp.eq.s32.totalorder %s13, 1
    %p38 = por %p36, %p37
    %p39 = scmp.ne.s32.totalorder %s30, %s31
    %p40 = scmp.eq.s32.totalorder %s13, 0
    %p41 = por %p39, %p40
    %p42 = scmp.ne.s32.totalorder %s30, %s31
    %p43 = scmp.eq.s32.totalorder %s14, 1
    %p44 = por %p42, %p43
    %p46 = scmp.ne.s32.totalorder %s31, %s45
    %p47 = scmp.eq.s32.totalorder %s14, 0
    %p48 = por %p46, %p47
    %s49 = ssub.s32 %s15, %s27
    %s50 = ssub.s32 %s16, %s23
    %s51 = sor.u32 %s49, %s50
    %p52 = scmp.eq.s32.totalorder %s51, 0
    %s54 = sadd.s32 %s53, 1
    %s55 = scalar_select %p52, %s53, %s54
    %p58 = pneg %p52
    %p59 = scmp.eq.s32.totalorder %s8, 1
    %p60 = por %p58, %p59
    %p61 = scmp.ne.s32.totalorder %s53, %s56
    %p62 = scmp.eq.s32.totalorder %s8, 0
    %p63 = por %p61, %p62
    %p64 = scmp.ne.s32.totalorder %s53, %s56
    %p65 = scmp.eq.s32.totalorder %s13, 1
    %p66 = por %p64, %p65
    %p67 = scmp.ne.s32.totalorder %s56, %s57
    %p68 = scmp.eq.s32.totalorder %s13, 0
    %p69 = por %p67, %p68
    %p70 = scmp.ne.s32.totalorder %s56, %s57
    %p71 = scmp.eq.s32.totalorder %s14, 1
    %p72 = por %p70, %p71
    %p74 = scmp.ne.s32.totalorder %s57, %s73
    %p75 = scmp.eq.s32.totalorder %s14, 0
    %p76 = por %p74, %p75
    %s77 = ssub.s32 %s15, %s27
    %s78 = ssub.s32 %s16, %s23
    %s79 = sor.u32 %s77, %s78
    %p80 = scmp.eq.s32.totalorder %s79, 0
    %s82 = sadd.s32 %s81, 1
    %s83 = scalar_select %p80, %s81, %s82
    %p86 = pneg %p80
    %p87 = scmp.eq.s32.totalorder %s8, 1
    %p88 = por %p86, %p87
    %p89 = scmp.ne.s32.totalorder %s81, %s84
    %p90 = scmp.eq.s32.totalorder %s8, 0
    %p91 = por %p89, %p90
    %p92 = scmp.ne.s32.totalorder %s81, %s84
    %p93 = scmp.eq.s32.totalorder %s13, 1
    %p94 = por %p92, %p93
    %p95 = scmp.ne.s32.totalorder %s84, %s85
    %p96 = scmp.eq.s32.totalorder %s13, 0
    %p97 = por %p95, %p96
    %p98 = scmp.ne.s32.totalorder %s84, %s85
    %p99 = scmp.eq.s32.totalorder %s14, 1
    %p100 = por %p98, %p99
    %p102 = scmp.ne.s32.totalorder %s85, %s101
    %p103 = scmp.eq.s32.totalorder %s14, 0
    %p104 = por %p102, %p103
    %p105 = scmp.le.s32.totalorder 1, %s8
    %p106 = scmp.lt.s32.totalorder %s8, 3
    %p107 = pnand %p105, %p106
    %p108 = pneg %p107
    // Predicated region
    $region9: #{patch_embed_forward.1} parent=5 // pred_check
      _
    $region10: #{patch_embed_forward.1} parent=5 // pred_check_branch
      %110 = sbr.rel (%p107) target = $region12
    $region11: #{patch_embed_forward.1} parent=5 // pred_region
      %s111 = ssub.s32 %s8, 1
      // Predicated region
      $region13: #{patch_embed_forward.1} parent=11 // pred_check
        %p112 = pneg %p41
      $region14: #{patch_embed_forward.1} parent=11 // pred_check_branch
        %114 = sbr.rel (%p112) target = $region16
      $region15: #{patch_embed_forward.1} parent=11 // pred_region
        _
      $region16: #{patch_embed_forward.1} parent=11 // pred_fallthru
        _
    $region12: #{patch_embed_forward.1} parent=5 // pred_fallthru
      _
    %p115 = scmp.lt.s32.totalorder %s8, 2
    // Predicated region
    $region17: #{patch_embed_forward.1} parent=5 // pred_check
      %p116 = pneg %p115
    $region18: #{patch_embed_forward.1} parent=5 // pred_check_branch
      %118 = sbr.rel (%p116) target = $region20
    $region19: #{patch_embed_forward.1} parent=5 // pred_region
      // Predicated region
      $region21: #{patch_embed_forward.1} parent=19 // pred_check
        %p119 = pneg %p63
      $region22: #{patch_embed_forward.1} parent=19 // pred_check_branch
        %121 = sbr.rel (%p119) target = $region24
      $region23: #{patch_embed_forward.1} parent=19 // pred_region
        %p122 = scmp.lt.s32.totalorder %s15, 1
        %s123 = scalar_select %p122, %s15, 1
        %p124 = scmp.lt.s32.totalorder %s16, 0
        %s125 = scalar_select %p124, %s16, 0
        %s126 = smul.addr %s123, 8
        %s127 = sadd.s32 %s125, %s126
        %s128 = smul.addr %s127, 4
        %s129 = scalar_lea.vmem %s1, %s128
      $region24: #{patch_embed_forward.1} parent=19 // pred_fallthru
        _
    $region20: #{patch_embed_forward.1} parent=5 // pred_fallthru
      _
    %p130 = scmp.le.s32.totalorder 1, %s8
    %p131 = scmp.lt.s32.totalorder %s8, 3
    %p132 = pnand %p130, %p131
    %p133 = pneg %p132
    // Predicated region
    $region25: #{patch_embed_forward.1} parent=5 // pred_check
      _
    $region26: #{patch_embed_forward.1} parent=5 // pred_check_branch
      %135 = sbr.rel (%p132) target = $region28
    $region27: #{patch_embed_forward.1} parent=5 // pred_region
      %s136 = ssub.s32 %s8, 1
      %p137 = pneg %p41
      %p138 = pneg %p38
      %p139 = scmp.lt.s32.totalorder %s17, 1
      %s140 = scalar_select %p139, %s17, 1
      %p141 = scmp.lt.s32.totalorder %s18, 0
      %s142 = scalar_select %p141, %s18, 0
      %s143 = smul.addr %s140, 8
      %s144 = sadd.s32 %s142, %s143
      %s145 = smul.addr %s144, 4
      %s146 = scalar_lea.vmem %s1, %s145
      %p147 = pneg %p69
      %p148 = pneg %p66
      %p149 = pneg %p97
      %p150 = pneg %p94
      %p151 = scmp.lt.s32.totalorder %s17, 1
      %s152 = scalar_select %p151, %s17, 1
      %p153 = scmp.lt.s32.totalorder %s18, 0
      %s154 = scalar_select %p153, %s18, 0
      %s155 = smul.addr %s152, 4
      %s156 = sadd.s32 %s154, %s155
      %s157 = smul.addr %s156, 8
      %s158 = scalar_lea.vmem %s2, %s157
      %p159 = scmp.lt.s32.totalorder %s17, 1
      %s160 = scalar_select %p159, %s17, 1
      %p161 = scmp.lt.s32.totalorder %s18, 0
      %s162 = scalar_select %p161, %s18, 0
      %s163 = smul.addr %s160, 8
      %s164 = sadd.s32 %s162, %s163
      %s165 = smul.addr %s164, 4
      %s166 = scalar_lea.vmem %s1, %s165
      %p167 = scmp.lt.s32.totalorder %s17, 1
      %s168 = scalar_select %p167, %s17, 1
      %p169 = scmp.lt.s32.totalorder %s18, 0
      %s170 = scalar_select %p169, %s18, 0
      %s171 = smul.addr %s168, 4
      %s172 = sadd.s32 %s170, %s171
      %s173 = smul.addr %s172, 8
      %s174 = scalar_lea.vmem %s2, %s173
      %v176 = vld [vmem:[%s0] sm:$0xf]
      %v177 = vld [vmem:[%s0 + $0x4] sm:$0xf]
      %v178 = vld [vmem:[%s0 + $0x8] sm:$0xf]
      %v179 = vld [vmem:[%s0 + $0xc] sm:$0xf]
      %v180 = vld [vmem:[%s166] sm:$0xf]
      %v181 = vld [vmem:[%s166 + $0x4] sm:$0xf]
      %v182 = vld [vmem:[%s166 + $0x8] sm:$0xf]
      %v183 = vld [vmem:[%s166 + $0xc] sm:$0xf]
      %v184 = vld [vmem:[%s166 + $0x10] sm:$0xf]
      %v185 = vld [vmem:[%s166 + $0x14] sm:$0xf]
      %v186 = vld [vmem:[%s166 + $0x18] sm:$0xf]
      %v187 = vld [vmem:[%s166 + $0x1c] sm:$0xf]
      %v192 = vunpack.c.l.b16 %v176
      %v193 = vunpack.c.l.b16 %v177
      %v194 = vunpack.c.l.b16 %v178
      %v195 = vunpack.c.l.b16 %v179
      %v196 = vpack.c.b16 %v193, %v192
      %v197 = vpack.c.b16 %v195, %v194
      %v206 = vunpack.c.l.b16 %v180
      %v207 = vunpack.c.l.b16 %v181
      %v208 = vunpack.c.l.b16 %v182
      %v209 = vunpack.c.l.b16 %v183
      %v210 = vunpack.c.l.b16 %v184
      %v211 = vunpack.c.l.b16 %v185
      %v212 = vunpack.c.l.b16 %v186
      %v213 = vunpack.c.l.b16 %v187
      %v214 = vpack.c.b16 %v207, %v206
      %v215 = vpack.c.b16 %v209, %v208
      %v216 = vpack.c.b16 %v211, %v210
      %v217 = vpack.c.b16 %v213, %v212
      %vm222 = vcmask 523264
      %v224 = vsel %vm222, %v196, 0
      %v227 = vsel %vm222, %v197, 0
      %229 = vmatprep.subr.bf16.mxu0 0
      %230 = vmatpush1.bf16.msra.mxu0 0
      %231 = vmatprep.subr.bf16.mxu0 0
      %232 = vmatpush1.bf16.msra.mxu0 0
      %233 = vmatprep.subr.bf16.mxu0 0
      %234 = vmatpush1.bf16.msra.mxu0 0
      %235 = vmatprep.subr.bf16.mxu0 0
      %236 = vmatpush1.bf16.msra.mxu0 0
      %237 = vmatprep.subr.bf16.mxu0 0
      %238 = vmatpush1.bf16.msra.mxu0 %v217
      %239 = vmatprep.subr.bf16.mxu0 0
      %240 = vmatpush1.bf16.msra.mxu0 %v216
      %241 = vmatprep.subr.bf16.mxu0 0
      %242 = vmatpush1.bf16.msra.mxu0 %v215
      %243 = vmatprep.subr.bf16.mxu0 0
      %244 = vmatpush1.bf16.msra.mxu0 %v214
      %245 = vmatprep.subr.bf16.mxu0 0
      %246 = vmatpush2.bf16.msra.mxu0 0
      %247 = vmatprep.subr.bf16.mxu0 0
      %248 = vmatpush2.bf16.msra.mxu0 0
      %249 = vmatprep.subr.bf16.mxu0 0
      %250 = vmatpush2.bf16.msra.mxu0 0
      %251 = vmatprep.subr.bf16.mxu0 0
      %252 = vmatpush2.bf16.msra.mxu0 0
      %253 = vmatprep.subr.bf16.mxu0 0
      %254 = vmatpush2.bf16.msra.mxu0 0
      %255 = vmatprep.subr.bf16.mxu0 0
      %256 = vmatpush2.bf16.msra.mxu0 0
      %257 = vmatprep.subr.bf16.mxu0 0
      %258 = vmatpush2.bf16.msra.mxu0 0
      %259 = vmatprep.subr.bf16.mxu0 0
      %260 = vmatpush2.bf16.msra.mxu0 0
      %261 = vmatprep.mubr.bf16.mxu0 0
      %262 = vmatmul.mubr.bf16.gmra.mxu0 %v224
      %v263 = vpop.f32.mrf.mxu0
      %v264 = vadd.f32 0.0, %v263
      %v265 = vpop.f32.mrf.mxu0
      %v266 = vpop.f32.mrf.mxu0
      %v267 = vadd.f32 0.0, %v266
      %v268 = vpop.f32.mrf.mxu0
      %269 = vmatprep.mubr.bf16.mxu0 0
      %270 = vmatmul.mubr.bf16.gmra.mxu0 %v227
      %v271 = vpop.f32.mrf.mxu0
      %v272 = vadd.f32 0.0, %v271
      %v273 = vpop.f32.mrf.mxu0
      %v274 = vpop.f32.mrf.mxu0
      %v275 = vadd.f32 0.0, %v274
      %v276 = vpop.f32.mrf.mxu0
      %277 = vdwg.mxu0
      %vm278 = vcmask 130048
      %279 = vst.msk [vmem:[%s174] sm:$0xff] %vm278, %v264
      %280 = vst.msk [vmem:[%s174 + $0x8] sm:$0xff] %vm278, %v267
      %281 = vst.msk [vmem:[%s174 + $0x10] sm:$0xff] %vm278, %v272
      %282 = vst.msk [vmem:[%s174 + $0x18] sm:$0xff] %vm278, %v275
      %p283 = scmp.lt.s32.totalorder %s17, 1
      %s284 = scalar_select %p283, %s17, 1
      %p285 = scmp.lt.s32.totalorder %s18, 0
      %s286 = scalar_select %p285, %s18, 0
      %s287 = smul.addr %s284, 4
      %s288 = sadd.s32 %s286, %s287
      %s289 = smul.addr %s288, 8
      %s290 = scalar_lea.vmem %s2, %s289
      // Predicated region
      $region29: #{patch_embed_forward.1} parent=27 // pred_check
        %p291 = pneg %p94
      $region30: #{patch_embed_forward.1} parent=27 // pred_check_branch
        %293 = sbr.rel (%p291) target = $region32
      $region31: #{patch_embed_forward.1} parent=27 // pred_region
        _
      $region32: #{patch_embed_forward.1} parent=27 // pred_fallthru
        _
    $region28: #{patch_embed_forward.1} parent=5 // pred_fallthru
      _
    %p294 = scmp.le.s32.totalorder 2, %s8
    // Predicated region
    $region33: #{patch_embed_forward.1} parent=5 // pred_check
      %p295 = pneg %p294
    $region34: #{patch_embed_forward.1} parent=5 // pred_check_branch
      %297 = sbr.rel (%p295) target = $region36
    $region35: #{patch_embed_forward.1} parent=5 // pred_region
      %s298 = ssub.s32 %s8, 2
      // Predicated region
      $region37: #{patch_embed_forward.1} parent=35 // pred_check
        %p299 = pneg %p100
      $region38: #{patch_embed_forward.1} parent=35 // pred_check_branch
        %301 = sbr.rel (%p299) target = $region40
      $region39: #{patch_embed_forward.1} parent=35 // pred_region
        %p302 = scmp.lt.s32.totalorder %s19, 1
        %s303 = scalar_select %p302, %s19, 1
        %p304 = scmp.lt.s32.totalorder %s20, 0
        %s305 = scalar_select %p304, %s20, 0
        %s306 = smul.addr %s303, 4
        %s307 = sadd.s32 %s305, %s306
        %s308 = smul.addr %s307, 8
        %s309 = scalar_lea.vmem %s2, %s308
      $region40: #{patch_embed_forward.1} parent=35 // pred_fallthru
        _
    $region36: #{patch_embed_forward.1} parent=5 // pred_fallthru
      _
  $region6: #{patch_embed_forward.1} parent=0 // loop_footer
    %s12 = sadd.s32 1, %s8
  $region7: #{patch_embed_forward.1} parent=0 // loop_footer_branch
    %7 = sbr.rel target = $region3
  $region8: #{patch_embed_forward.1} parent=0 // loop_exit
    _

</llo_original>
